<compile_context>
chip_gen: v6e
topology: v6e:2x2x1
jax: 0.10.0
libtpu: 0.0.40
codegen_flags: <defaults>
</compile_context>

<pallas_src>
import functools

import jax
import jax.numpy as jnp
from jax.experimental import pallas as pl
from jax.experimental.pallas import tpu as pltpu

_VMEM_LIMIT = 32 * 1024 * 1024          # safe on v5e/v6e (128 MiB) and v7x (64 MiB)
_FUSED_VMEM_BUDGET = 24 * 1024 * 1024   # leave headroom under the 32 MiB limit


def _round_up(x, m):
    return ((x + m - 1) // m) * m


def _pick_tile(dim, tile, align):
    """Full-extent block for small dims, otherwise an `align`-aligned tile."""
    if dim <= tile:
        return dim                       # block == full dim: always legal
    return max(align, (tile // align) * align)


def _apply_act(x, activation):
    if activation == "relu":
        return jnp.maximum(x, 0.0)
    if activation == "sigmoid_abs":
        # sigmoid is already positive; abs kept for exact torch semantics.
        return jnp.abs(jax.nn.sigmoid(x))
    return x


# --------------------------------------------------------------------------
# Fused 3-layer discriminator kernel
# --------------------------------------------------------------------------
def _disc_fused_kernel(x_ref, w1_ref, w2_ref, w3t_ref, o_ref, *, use_bf16):
    def cast(v):
        return v.astype(jnp.bfloat16) if use_bf16 else v

    x = cast(x_ref[...])
    h1 = jnp.maximum(
        jnp.dot(x, cast(w1_ref[...]), preferred_element_type=jnp.float32), 0.0)
    h2 = jnp.maximum(
        jnp.dot(cast(h1), cast(w2_ref[...]), preferred_element_type=jnp.float32), 0.0)
    # Final (D -> 1) layer as multiply + lane reduction: avoids a padded
    # 128-wide MXU tile / padded W3 for a single output column.
    logits = jnp.sum(h2 * w3t_ref[...], axis=1, keepdims=True)
    o_ref[...] = jnp.abs(jax.nn.sigmoid(logits)).astype(o_ref.dtype)


def _fused_vmem_bytes(tm, d):
    dbl = 2                                     # pipeline double-buffering
    weights = dbl * (2 * d * d + d) * 4         # w1, w2, w3t blocks
    x_blk = dbl * tm * d * 4
    out_blk = dbl * tm * 4
    temps = 3 * tm * d * 4                      # h1 / h2 / elementwise temporaries
    return weights + x_blk + out_blk + temps


# --------------------------------------------------------------------------
# Per-layer fallback kernels (generic activation(x @ w))
# --------------------------------------------------------------------------
def _mm_act_kernel_single_k(x_ref, w_ref, o_ref, *, activation, use_bf16):
    """K fits in one block: one MXU dot, activation fused, direct write."""
    x, w = x_ref[...], w_ref[...]
    if use_bf16:
        x, w = x.astype(jnp.bfloat16), w.astype(jnp.bfloat16)
    acc = jnp.dot(x, w, preferred_element_type=jnp.float32)
    o_ref[...] = _apply_act(acc, activation).astype(o_ref.dtype)


def _mm_act_kernel_multi_k(x_ref, w_ref, o_ref, *, activation, use_bf16):
    """Tiled K: k==0 writes the partial product directly (no zero-init RMW),
    k>0 accumulates into the resident f32 output block, last k finalizes."""
    k = pl.program_id(2)
    x, w = x_ref[...], w_ref[...]
    if use_bf16:
        x, w = x.astype(jnp.bfloat16), w.astype(jnp.bfloat16)
    prod = jnp.dot(x, w, preferred_element_type=jnp.float32)

    @pl.when(k == 0)
    def _():
        o_ref[...] = prod

    @pl.when(k > 0)
    def _():
        o_ref[...] += prod

    @pl.when(k == pl.num_programs(2) - 1)
    def _():
        o_ref[...] = _apply_act(o_ref[...], activation)


def _mv_act_kernel(x_ref, wt_ref, o_ref, *, activation):
    """N == 1 layer: multiply + lane reduction (no MXU column padding)."""
    prod = jnp.sum(x_ref[...] * wt_ref[...], axis=1, keepdims=True)
    o_ref[...] = _apply_act(prod, activation).astype(o_ref.dtype)


def dense_act(x, w, activation="none", *, tm=512, tn=512, tk=512, use_bf16=False):
    """Fused `activation(x @ w)` for f32 matrices (torch.mm semantics).

    M and N are never padded in HBM (masked edge tiles via pl.cdiv grids);
    only a tiled K axis is zero-padded (required for reduction correctness).
    """
    M, K = x.shape
    K2, N = w.shape
    assert K == K2, "inner dimensions must match"

    tm_eff = _pick_tile(M, tm, 8)

    # ---------- N == 1: matrix-vector reduce kernel (K kept un-tiled) ----------
    if N == 1:
        wt = w.T  # (1, K), tiny
        cost = pl.CostEstimate(
            flops=2 * M * K,
            transcendentals=(M if activation == "sigmoid_abs" else 0),
            bytes_accessed=4 * (M * K + K + M))
        kernel = functools.partial(_mv_act_kernel, activation=activation)
        return pl.pallas_call(
            kernel,
            out_shape=jax.ShapeDtypeStruct((M, 1), jnp.float32),
            grid_spec=pltpu.PrefetchScalarGridSpec(
                num_scalar_prefetch=0,
                grid=(pl.cdiv(M, tm_eff),),
                in_specs=[
                    pl.BlockSpec((tm_eff, K), lambda i: (i, 0)),
                    pl.BlockSpec((1, K), lambda i: (0, 0)),
                ],
                out_specs=pl.BlockSpec((tm_eff, 1), lambda i: (i, 0)),
            ),
            compiler_params=pltpu.CompilerParams(
                dimension_semantics=("parallel",),
                vmem_limit_bytes=_VMEM_LIMIT,
            ),
            cost_estimate=cost,
        )(x, wt)

    tn_eff = _pick_tile(N, tn, 128)

    # ---------- K handling: only the contraction axis ever gets zero-padded ----------
    if K <= tk:
        tk_eff, n_k = K, 1
        x_in, w_in = x, w
    else:
        tk_eff = max(128, (tk // 128) * 128)
        Kp = _round_up(K, tk_eff)
        n_k = Kp // tk_eff
        x_in = x if Kp == K else jnp.pad(x, ((0, 0), (0, Kp - K)))
        w_in = w if Kp == K else jnp.pad(w, ((0, Kp - K), (0, 0)))

    cost = pl.CostEstimate(
        flops=2 * M * N * K,
        transcendentals=(M * N if activation == "sigmoid_abs" else 0),
        bytes_accessed=4 * (M * K + K * N + M * N))

    grid_m, grid_n = pl.cdiv(M, tm_eff), pl.cdiv(N, tn_eff)

    if n_k == 1:
        kernel = functools.partial(_mm_act_kernel_single_k,
                                   activation=activation, use_bf16=use_bf16)
        return pl.pallas_call(
            kernel,
            out_shape=jax.ShapeDtypeStruct((M, N), jnp.float32),
            grid_spec=pltpu.PrefetchScalarGridSpec(
                num_scalar_prefetch=0,
                grid=(grid_m, grid_n),
                in_specs=[
                    pl.BlockSpec((tm_eff, K), lambda i, j: (i, 0)),
                    pl.BlockSpec((K, tn_eff), lambda i, j: (0, j)),
                ],
                out_specs=pl.BlockSpec((tm_eff, tn_eff), lambda i, j: (i, j)),
            ),
            compiler_params=pltpu.CompilerParams(
                dimension_semantics=("parallel", "parallel"),
                vmem_limit_bytes=_VMEM_LIMIT,
            ),
            cost_estimate=cost,
        )(x_in, w_in)

    kernel = functools.partial(_mm_act_kernel_multi_k,
                               activation=activation, use_bf16=use_bf16)
    return pl.pallas_call(
        kernel,
        out_shape=jax.ShapeDtypeStruct((M, N), jnp.float32),
        grid_spec=pltpu.PrefetchScalarGridSpec(
            num_scalar_prefetch=0,
            grid=(grid_m, grid_n, n_k),
            in_specs=[
                pl.BlockSpec((tm_eff, tk_eff), lambda i, j, k: (i, k)),
                pl.BlockSpec((tk_eff, tn_eff), lambda i, j, k: (k, j)),
            ],
            out_specs=pl.BlockSpec((tm_eff, tn_eff), lambda i, j, k: (i, j)),
        ),
        compiler_params=pltpu.CompilerParams(
            # NOTE: K must remain "arbitrary" — the output block is revisited
            # and accumulated across k; only i/j may be parallel.
            dimension_semantics=("parallel", "parallel", "arbitrary"),
            vmem_limit_bytes=_VMEM_LIMIT,
        ),
        cost_estimate=cost,
    )(x_in, w_in)


# --------------------------------------------------------------------------
# Discriminator forward
# --------------------------------------------------------------------------
def discriminator_forward(inputs, w1, w2, w3, *, tm=256, use_bf16=False, fused=None):
    """Pallas equivalent of Discriminator.forward.

    Default path is a single fused kernel (weights + activations VMEM-resident);
    falls back to per-layer kernels when hr_dim is too large for the fused
    VMEM budget.
    """
    M, D = inputs.shape
    assert w1.shape == (D, D) and w2.shape == (D, D) and w3.shape == (D, 1)

    tm_eff = _pick_tile(M, tm, 8)
    if fused is None:
        fused = _fused_vmem_bytes(tm_eff, D) <= _FUSED_VMEM_BUDGET

    if not fused:
        h1 = dense_act(inputs, w1, activation="relu", use_bf16=use_bf16)
        h2 = dense_act(h1, w2, activation="relu", use_bf16=use_bf16)
        return dense_act(h2, w3, activation="sigmoid_abs", use_bf16=use_bf16)

    w3t = w3.T  # (1, D): consumed as a broadcast row inside the kernel
    kernel = functools.partial(_disc_fused_kernel, use_bf16=use_bf16)
    cost = pl.CostEstimate(
        flops=4 * M * D * D + 2 * M * D,
        transcendentals=M,
        bytes_accessed=4 * (M * D + 2 * D * D + D + M))

    return pl.pallas_call(
        kernel,
        out_shape=jax.ShapeDtypeStruct((M, 1), jnp.float32),
        grid_spec=pltpu.PrefetchScalarGridSpec(
            num_scalar_prefetch=0,
            grid=(pl.cdiv(M, tm_eff),),
            in_specs=[
                pl.BlockSpec((tm_eff, D), lambda i: (i, 0)),
                pl.BlockSpec((D, D), lambda i: (0, 0)),   # resident, fetched once
                pl.BlockSpec((D, D), lambda i: (0, 0)),   # resident, fetched once
                pl.BlockSpec((1, D), lambda i: (0, 0)),   # resident, fetched once
            ],
            out_specs=pl.BlockSpec((tm_eff, 1), lambda i: (i, 0)),
        ),
        compiler_params=pltpu.CompilerParams(
            # M axis parallel: shards row-tiles across v7x's 2 TensorCores.
            dimension_semantics=("parallel",),
            vmem_limit_bytes=_VMEM_LIMIT,
        ),
        cost_estimate=cost,
    )(inputs, w1, w2, w3t)


def _reference_discriminator(inputs, w1, w2, w3):
    hi = jax.lax.Precision.HIGHEST
    h1 = jnp.maximum(jnp.dot(inputs, w1, precision=hi), 0.0)
    h2 = jnp.maximum(jnp.dot(h1, w2, precision=hi), 0.0)
    return jnp.abs(jax.nn.sigmoid(jnp.dot(h2, w3, precision=hi)))


if __name__ == "__main__":
    key = jax.random.PRNGKey(0)
    k_x, k_w1, k_w2, k_w3, k_x2, k_w4, k_x3 = jax.random.split(key, 7)

    # Small Discriminator: 16 rows, hr_dim = 32 (weights ~ N(0, 0.01) as in Dense).
    n_rows, hr_dim = 16, 32
    x = jax.random.normal(k_x, (n_rows, hr_dim), dtype=jnp.float32)
    w1 = 0.01 * jax.random.normal(k_w1, (hr_dim, hr_dim), dtype=jnp.float32)
    w2 = 0.01 * jax.random.normal(k_w2, (hr_dim, hr_dim), dtype=jnp.float32)
    w3 = 0.01 * jax.random.normal(k_w3, (hr_dim, 1), dtype=jnp.float32)

    ref = _reference_discriminator(x, w1, w2, w3)

    # Fused single-kernel path (the default).
    out = jax.block_until_ready(discriminator_forward(x, w1, w2, w3))
    assert out.shape == (n_rows, 1)
    assert jnp.allclose(out, ref, atol=1e-4, rtol=1e-4), "fused discriminator mismatch"

    # Per-layer fallback path (used when hr_dim exceeds the fused VMEM budget).
    out_l = jax.block_until_ready(discriminator_forward(x, w1, w2, w3, fused=False))
    assert jnp.allclose(out_l, ref, atol=1e-4, rtol=1e-4), "per-layer discriminator mismatch"

    # Fused path with a masked M-edge tile (M not a multiple of tm).
    xe = jax.random.normal(k_x3, (40, hr_dim), dtype=jnp.float32)
    out_e = jax.block_until_ready(discriminator_forward(xe, w1, w2, w3, tm=32))
    refe = _reference_discriminator(xe, w1, w2, w3)
    assert out_e.shape == (40, 1)
    assert jnp.allclose(out_e, refe, atol=1e-4, rtol=1e-4), "edge-tile fused mismatch"

    # Raw Dense path (plain matmul, no activation), single-K kernel.
    d1 = jax.block_until_ready(dense_act(x, w1, activation="none"))
    assert jnp.allclose(
        d1, jnp.dot(x, w1, precision=jax.lax.Precision.HIGHEST), atol=1e-4, rtol=1e-4
    ), "dense matmul mismatch"

    # Tiled-K (write-then-accumulate) path on non-tile-multiple M/N, no M/N padding.
    xb = jax.random.normal(k_x2, (40, 384), dtype=jnp.float32)
    wb = 0.01 * jax.random.normal(k_w4, (384, 200), dtype=jnp.float32)
    db = jax.block_until_ready(dense_act(xb, wb, activation="relu", tk=128))
    refb = jnp.maximum(jnp.dot(xb, wb, precision=jax.lax.Precision.HIGHEST), 0.0)
    assert db.shape == (40, 200)
    assert jnp.allclose(db, refb, atol=1e-4, rtol=1e-4), "multi-k path mismatch"

    print("KERNEL_OK")
</pallas_src>

<mosaic_0001>
module attributes {stable_mosaic.version = 11 : i64} {
  func.func @_disc_fused_kernel(%arg0: i32, %arg1: memref<16x32xf32, #tpu.memory_space<vmem>>, %arg2: memref<32x32xf32, #tpu.memory_space<vmem>>, %arg3: memref<32x32xf32, #tpu.memory_space<vmem>>, %arg4: memref<1x32xf32, #tpu.memory_space<vmem>>, %arg5: memref<16x1xf32, #tpu.memory_space<vmem>>) attributes {dimension_semantics = [#tpu.dimension_semantics<parallel>], iteration_bounds = array<i64: 1>, scalar_prefetch = 0 : i64, scratch_operands = 0 : i64, tpu.core_type = #tpu.core_type<tc>, window_params = [{transform_indices = @transform_0, window_bounds = array<i64: 16, 32>}, {pipeline_mode = #tpu.pipeline_mode<synchronous>, transform_indices = @transform_1, window_bounds = array<i64: 32, 32>}, {pipeline_mode = #tpu.pipeline_mode<synchronous>, transform_indices = @transform_2, window_bounds = array<i64: 32, 32>}, {pipeline_mode = #tpu.pipeline_mode<synchronous>, transform_indices = @transform_3, window_bounds = array<i64: 1, 32>}, {transform_indices = @transform_4, window_bounds = array<i64: 16, 1>}]} {
    %c0 = arith.constant 0 : index
    %c0_0 = arith.constant 0 : index
    %0 = vector.load %arg1[%c0, %c0_0] : memref<16x32xf32, #tpu.memory_space<vmem>>, vector<16x32xf32>
    %c0_1 = arith.constant 0 : index
    %c0_2 = arith.constant 0 : index
    %1 = vector.load %arg2[%c0_1, %c0_2] : memref<32x32xf32, #tpu.memory_space<vmem>>, vector<32x32xf32>
    %cst = arith.constant dense<0.000000e+00> : vector<16x32xf32>
    %2 = tpu.matmul %0, %1, %cst {dimension_numbers = #tpu.dot_dimension_numbers<[1], [0], [0], [1], [0, 0, 1, 1], [], []>} : vector<16x32xf32>, vector<32x32xf32>, vector<16x32xf32> -> vector<16x32xf32>
    %cst_3 = arith.constant 0.000000e+00 : f32
    %3 = vector.broadcast %cst_3 : f32 to vector<16x32xf32>
    %4 = arith.maximumf %2, %3 : vector<16x32xf32>
    %c0_4 = arith.constant 0 : index
    %c0_5 = arith.constant 0 : index
    %5 = vector.load %arg3[%c0_4, %c0_5] : memref<32x32xf32, #tpu.memory_space<vmem>>, vector<32x32xf32>
    %cst_6 = arith.constant dense<0.000000e+00> : vector<16x32xf32>
    %6 = tpu.matmul %4, %5, %cst_6 {dimension_numbers = #tpu.dot_dimension_numbers<[1], [0], [0], [1], [0, 0, 1, 1], [], []>} : vector<16x32xf32>, vector<32x32xf32>, vector<16x32xf32> -> vector<16x32xf32>
    %cst_7 = arith.constant 0.000000e+00 : f32
    %7 = vector.broadcast %cst_7 : f32 to vector<16x32xf32>
    %8 = arith.maximumf %6, %7 : vector<16x32xf32>
    %c0_8 = arith.constant 0 : index
    %c0_9 = arith.constant 0 : index
    %9 = vector.load %arg4[%c0_8, %c0_9] : memref<1x32xf32, #tpu.memory_space<vmem>>, vector<1x32xf32>
    %10 = vector.broadcast %9 : vector<1x32xf32> to vector<16x32xf32>
    %11 = arith.mulf %8, %10 : vector<16x32xf32>
    %cst_10 = arith.constant dense<0.000000e+00> : vector<16xf32>
    %12 = vector.multi_reduction <add>, %11, %cst_10 [1] : vector<16x32xf32> to vector<16xf32>
    %13 = vector.shape_cast %12 : vector<16xf32> to vector<16x1xf32>
    %14 = arith.negf %13 : vector<16x1xf32>
    %15 = math.exp %14 : vector<16x1xf32>
    %cst_11 = arith.constant 1.000000e+00 : f32
    %16 = vector.broadcast %cst_11 : f32 to vector<16x1xf32>
    %17 = arith.addf %16, %15 : vector<16x1xf32>
    %18 = arith.divf %16, %17 : vector<16x1xf32>
    %19 = math.absf %18 : vector<16x1xf32>
    %c0_12 = arith.constant 0 : index
    %c0_13 = arith.constant 0 : index
    %20 = vector.load %arg5[%c0_12, %c0_13] : memref<16x1xf32, #tpu.memory_space<vmem>>, vector<16x1xf32>
    tpu.vector_store %arg5[%c0_12, %c0_13], %19 {strides = array<i32>} : memref<16x1xf32, #tpu.memory_space<vmem>>, vector<16x1xf32>,
    return
  }
  func.func @transform_0(%arg0: i32) -> (i32, i32) {
    %c0_i32 = arith.constant 0 : i32
    %c0_i32_0 = arith.constant 0 : i32
    return %arg0, %c0_i32 : i32, i32
  }
  func.func @transform_1(%arg0: i32) -> (i32, i32) {
    %c0_i32 = arith.constant 0 : i32
    %c0_i32_0 = arith.constant 0 : i32
    %c0_i32_1 = arith.constant 0 : i32
    return %c0_i32, %c0_i32_0 : i32, i32
  }
  func.func @transform_2(%arg0: i32) -> (i32, i32) {
    %c0_i32 = arith.constant 0 : i32
    %c0_i32_0 = arith.constant 0 : i32
    %c0_i32_1 = arith.constant 0 : i32
    return %c0_i32, %c0_i32_0 : i32, i32
  }
  func.func @transform_3(%arg0: i32) -> (i32, i32) {
    %c0_i32 = arith.constant 0 : i32
    %c0_i32_0 = arith.constant 0 : i32
    %c0_i32_1 = arith.constant 0 : i32
    return %c0_i32, %c0_i32_0 : i32, i32
  }
  func.func @transform_4(%arg0: i32) -> (i32, i32) {
    %c0_i32 = arith.constant 0 : i32
    %c0_i32_0 = arith.constant 0 : i32
    return %arg0, %c0_i32 : i32, i32
  }
}

</mosaic_0001>

<llo_original>
// kernel: tpu_custom_call.1
$region0: #{tpu_custom_call.1}
  #allocation0 [shape = 'u32[]', space=smem, size = 0x4, offset = 0x4, fixed_abs, tag = 'smem constant byte address 0x4 - core index']
  #allocation1 [shape = 'u32[144,128]{1,0:T(1,128)}', space=vmem, size = 0x12000, scoped, tag = 'internal scratch']
  %s0 = inlined_call_operand.hbm [shape: f32[16,32], index: 0, kind: input, shape index: {}]
  %s1 = inlined_call_operand.hbm [shape: f32[32,32], index: 1, kind: input, shape index: {}]
  %s2 = inlined_call_operand.hbm [shape: f32[32,32], index: 2, kind: input, shape index: {}]
  %s3 = inlined_call_operand.vmem [shape: f32[1,32], index: 3, kind: input, shape index: {}]
  %s4 = inlined_call_operand.vmem [shape: f32[16,1], index: 4, kind: output, shape index: {}]
  %s5 = sld [smem:[#allocation0]]
  $region38: #{tpu_custom_call.1} parent=0
    _
  %s7 = ssub.s32 1, %s5
  %s8 = scalar_select 0, %s7, %s5
  $region1: #{tpu_custom_call.1} parent=0
    #allocation2 [shape = 'u8[8192]{0}', space=vmem, size = 0x2000, scoped, tag = 'input window, operand 0, single buffered']
    #allocation3 [shape = 's32[1]{0}', space=sflag, size = 0x4, scoped, tag = 'scoped memory for tpu_custom_call.1']
    #allocation4 [shape = 'u8[16384]{0}', space=vmem, size = 0x4000, scoped, tag = 'input window, operand 1, single buffered']
    #allocation5 [shape = 's32[1]{0}', space=sflag, size = 0x4, scoped, tag = 'scoped memory for tpu_custom_call.1']
    #allocation6 [shape = 'u8[16384]{0}', space=vmem, size = 0x4000, scoped, tag = 'input window, operand 2, single buffered']
    %9 = vsyncpa [#allocation3], 0
    %10 = vsyncpa [#allocation5], 0
    // Predicated region
    $region2: #{tpu_custom_call.1} parent=1 // pred_check
      _
    $region3: #{tpu_custom_call.1} parent=1 // pred_check_branch
      %12 = sbr.rel (0) target = $region5
    $region4: #{tpu_custom_call.1} parent=1 // pred_region
      %s14 = ssub.s32 256, 256
      %15 = vsyncadd [#allocation3], %s14
      %s16 = sshll.u32 [#allocation2], 4
      %s17 = int_to_ptr.vmem [resolvable:$true] %s16
      %22 = dma.hbm_to_vmem [thread:$0]  %s0, 256, %s17, [#allocation3], 128, 128, 8
    $region5: #{tpu_custom_call.1} parent=1 // pred_fallthru
      _
    // Predicated region
    $region6: #{tpu_custom_call.1} parent=1 // pred_check
      _
    $region7: #{tpu_custom_call.1} parent=1 // pred_check_branch
      %24 = sbr.rel (0) target = $region9
    $region8: #{tpu_custom_call.1} parent=1 // pred_region
      %s26 = ssub.s32 512, 512
      %27 = vsyncadd [#allocation5], %s26
      %s28 = sshll.u32 [#allocation4], 4
      %s29 = int_to_ptr.vmem [resolvable:$true] %s28
      %34 = dma.hbm_to_vmem [thread:$0]  %s1, 512, %s29, [#allocation5], 128, 128, 8
    $region9: #{tpu_custom_call.1} parent=1 // pred_fallthru
      _
    // Predicated region
    $region10: #{tpu_custom_call.1} parent=1 // pred_check
      _
    $region11: #{tpu_custom_call.1} parent=1 // pred_check_branch
      %36 = sbr.rel (0) target = $region13
    $region12: #{tpu_custom_call.1} parent=1 // pred_region
      %s38 = ssub.s32 512, 512
      %39 = vsyncadd [#allocation5], %s38
      %s40 = sshll.u32 [#allocation6], 4
      %s41 = int_to_ptr.vmem [resolvable:$true] %s40
      %46 = dma.hbm_to_vmem [thread:$0]  %s2, 512, %s41, [#allocation5], 128, 128, 8
    $region13: #{tpu_custom_call.1} parent=1 // pred_fallthru
      _
    // Predicated region
    $region14: #{tpu_custom_call.1} parent=1 // pred_check
      _
    $region15: #{tpu_custom_call.1} parent=1 // pred_check_branch
      %48 = sbr.rel (0) target = $region17
    $region16: #{tpu_custom_call.1} parent=1 // pred_region
      _
    $region17: #{tpu_custom_call.1} parent=1 // pred_fallthru
      _
    // Predicated region
    $region18: #{tpu_custom_call.1} parent=1 // pred_check
      _
    $region19: #{tpu_custom_call.1} parent=1 // pred_check_branch
      %50 = sbr.rel (0) target = $region21
    $region20: #{tpu_custom_call.1} parent=1 // pred_region
      %51 = dma.done [#allocation3], 256
    $region21: #{tpu_custom_call.1} parent=1 // pred_fallthru
      _
    // Predicated region
    $region22: #{tpu_custom_call.1} parent=1 // pred_check
      _
    $region23: #{tpu_custom_call.1} parent=1 // pred_check_branch
      %53 = sbr.rel (0) target = $region25
    $region24: #{tpu_custom_call.1} parent=1 // pred_region
      %54 = dma.done [#allocation5], 512
    $region25: #{tpu_custom_call.1} parent=1 // pred_fallthru
      _
    // Predicated region
    $region26: #{tpu_custom_call.1} parent=1 // pred_check
      _
    $region27: #{tpu_custom_call.1} parent=1 // pred_check_branch
      %56 = sbr.rel (0) target = $region29
    $region28: #{tpu_custom_call.1} parent=1 // pred_region
      %57 = dma.done [#allocation5], 512
    $region29: #{tpu_custom_call.1} parent=1 // pred_fallthru
      _
    %v58 = vld [vmem:[#allocation2] sm:$0xff]
    %v59 = vld [vmem:[#allocation2 + $0x8] sm:$0xff]
    %v60 = vld [vmem:[#allocation4] sm:$0xff]
    %v61 = vld [vmem:[#allocation4 + $0x8] sm:$0xff]
    %v62 = vld [vmem:[#allocation4 + $0x10] sm:$0xff]
    %v63 = vld [vmem:[#allocation4 + $0x18] sm:$0xff]
    %vm64 = vcmask 261120
    %v66 = vsel %vm64, %v58, 0
    %v69 = vsel %vm64, %v59, 0
    %71 = vmatprep.subr.mxu0 0.0
    %72 = vmatpush1.msra.mxu0 0.0
    %73 = vmatprep.subr.mxu0 0.0
    %74 = vmatpush1.msra.mxu0 0.0
    %75 = vmatprep.subr.mxu0 0.0
    %76 = vmatpush1.msra.mxu0 0.0
    %77 = vmatprep.subr.mxu0 0.0
    %78 = vmatpush1.msra.mxu0 0.0
    %79 = vmatprep.subr.mxu0 0.0
    %80 = vmatpush1.msra.mxu0 0.0
    %81 = vmatprep.subr.mxu0 0.0
    %82 = vmatpush1.msra.mxu0 0.0
    %83 = vmatprep.subr.mxu0 0.0
    %84 = vmatpush1.msra.mxu0 0.0
    %85 = vmatprep.subr.mxu0 0.0
    %86 = vmatpush1.msra.mxu0 0.0
    %87 = vmatprep.subr.mxu0 0.0
    %88 = vmatpush1.msra.mxu0 0.0
    %89 = vmatprep.subr.mxu0 0.0
    %90 = vmatpush1.msra.mxu0 0.0
    %91 = vmatprep.subr.mxu0 0.0
    %92 = vmatpush1.msra.mxu0 0.0
    %93 = vmatprep.subr.mxu0 0.0
    %94 = vmatpush1.msra.mxu0 0.0
    %95 = vmatprep.subr.mxu0 0.0
    %96 = vmatpush1.msra.mxu0 %v63
    %97 = vmatprep.subr.mxu0 0.0
    %98 = vmatpush1.msra.mxu0 %v62
    %99 = vmatprep.subr.mxu0 0.0
    %100 = vmatpush1.msra.mxu0 %v61
    %101 = vmatprep.subr.mxu0 0.0
    %102 = vmatpush1.msra.mxu0 %v60
    %103 = vmatprep.subr.mxu0 0.0
    %104 = vmatpush2.msra.mxu0 0.0
    %105 = vmatprep.subr.mxu0 0.0
    %106 = vmatpush2.msra.mxu0 0.0
    %107 = vmatprep.subr.mxu0 0.0
    %108 = vmatpush2.msra.mxu0 0.0
    %109 = vmatprep.subr.mxu0 0.0
    %110 = vmatpush2.msra.mxu0 0.0
    %111 = vmatprep.subr.mxu0 0.0
    %112 = vmatpush2.msra.mxu0 0.0
    %113 = vmatprep.subr.mxu0 0.0
    %114 = vmatpush2.msra.mxu0 0.0
    %115 = vmatprep.subr.mxu0 0.0
    %116 = vmatpush2.msra.mxu0 0.0
    %117 = vmatprep.subr.mxu0 0.0
    %118 = vmatpush2.msra.mxu0 0.0
    %119 = vmatprep.subr.mxu0 0.0
    %120 = vmatpush2.msra.mxu0 0.0
    %121 = vmatprep.subr.mxu0 0.0
    %122 = vmatpush2.msra.mxu0 0.0
    %123 = vmatprep.subr.mxu0 0.0
    %124 = vmatpush2.msra.mxu0 0.0
    %125 = vmatprep.subr.mxu0 0.0
    %126 = vmatpush2.msra.mxu0 0.0
    %127 = vmatprep.subr.mxu0 0.0
    %128 = vmatpush2.msra.mxu0 0.0
    %129 = vmatprep.subr.mxu0 0.0
    %130 = vmatpush2.msra.mxu0 0.0
    %131 = vmatprep.subr.mxu0 0.0
    %132 = vmatpush2.msra.mxu0 0.0
    %133 = vmatprep.subr.mxu0 0.0
    %134 = vmatpush2.msra.mxu0 0.0
    %135 = vmatprep.mubr.f32.mxu0 0.0
    %136 = vmatmul.mubr.f32.gmra.mxu0 %v66
    %v137 = vpop.f32.mrf.mxu0
    %v138 = vadd.f32 0.0, %v137
    %v139 = vpop.f32.mrf.mxu0
    %140 = vmatprep.mubr.f32.mxu0 0.0
    %141 = vmatmul.mubr.f32.gmra.mxu0 %v69
    %v142 = vpop.f32.mrf.mxu0
    %v143 = vadd.f32 0.0, %v142
    %v144 = vpop.f32.mrf.mxu0
    %145 = vdwg.mxu0
    %v146 = vmax.f32 %v138, 0.0
    %v147 = vmax.f32 %v143, 0.0
    %v148 = vld [vmem:[#allocation6] sm:$0xff]
    %v149 = vld [vmem:[#allocation6 + $0x8] sm:$0xff]
    %v150 = vld [vmem:[#allocation6 + $0x10] sm:$0xff]
    %v151 = vld [vmem:[#allocation6 + $0x18] sm:$0xff]
    %v153 = vsel %vm64, %v146, 0
    %v156 = vsel %vm64, %v147, 0
    %158 = vmatprep.subr.mxu0 0.0
    %159 = vmatpush1.msra.mxu0 0.0
    %160 = vmatprep.subr.mxu0 0.0
    %161 = vmatpush1.msra.mxu0 0.0
    %162 = vmatprep.subr.mxu0 0.0
    %163 = vmatpush1.msra.mxu0 0.0
    %164 = vmatprep.subr.mxu0 0.0
    %165 = vmatpush1.msra.mxu0 0.0
    %166 = vmatprep.subr.mxu0 0.0
    %167 = vmatpush1.msra.mxu0 0.0
    %168 = vmatprep.subr.mxu0 0.0
    %169 = vmatpush1.msra.mxu0 0.0
    %170 = vmatprep.subr.mxu0 0.0
    %171 = vmatpush1.msra.mxu0 0.0
    %172 = vmatprep.subr.mxu0 0.0
    %173 = vmatpush1.msra.mxu0 0.0
    %174 = vmatprep.subr.mxu0 0.0
    %175 = vmatpush1.msra.mxu0 0.0
    %176 = vmatprep.subr.mxu0 0.0
    %177 = vmatpush1.msra.mxu0 0.0
    %178 = vmatprep.subr.mxu0 0.0
    %179 = vmatpush1.msra.mxu0 0.0
    %180 = vmatprep.subr.mxu0 0.0
    %181 = vmatpush1.msra.mxu0 0.0
    %182 = vmatprep.subr.mxu0 0.0
    %183 = vmatpush1.msra.mxu0 %v151
    %184 = vmatprep.subr.mxu0 0.0
    %185 = vmatpush1.msra.mxu0 %v150
    %186 = vmatprep.subr.mxu0 0.0
    %187 = vmatpush1.msra.mxu0 %v149
    %188 = vmatprep.subr.mxu0 0.0
    %189 = vmatpush1.msra.mxu0 %v148
    %190 = vmatprep.subr.mxu0 0.0
    %191 = vmatpush2.msra.mxu0 0.0
    %192 = vmatprep.subr.mxu0 0.0
    %193 = vmatpush2.msra.mxu0 0.0
    %194 = vmatprep.subr.mxu0 0.0
    %195 = vmatpush2.msra.mxu0 0.0
    %196 = vmatprep.subr.mxu0 0.0
    %197 = vmatpush2.msra.mxu0 0.0
    %198 = vmatprep.subr.mxu0 0.0
    %199 = vmatpush2.msra.mxu0 0.0
    %200 = vmatprep.subr.mxu0 0.0
    %201 = vmatpush2.msra.mxu0 0.0
    %202 = vmatprep.subr.mxu0 0.0
    %203 = vmatpush2.msra.mxu0 0.0
    %204 = vmatprep.subr.mxu0 0.0
    %205 = vmatpush2.msra.mxu0 0.0
    %206 = vmatprep.subr.mxu0 0.0
    %207 = vmatpush2.msra.mxu0 0.0
    %208 = vmatprep.subr.mxu0 0.0
    %209 = vmatpush2.msra.mxu0 0.0
    %210 = vmatprep.subr.mxu0 0.0
    %211 = vmatpush2.msra.mxu0 0.0
    %212 = vmatprep.subr.mxu0 0.0
    %213 = vmatpush2.msra.mxu0 0.0
    %214 = vmatprep.subr.mxu0 0.0
    %215 = vmatpush2.msra.mxu0 0.0
    %216 = vmatprep.subr.mxu0 0.0
    %217 = vmatpush2.msra.mxu0 0.0
    %218 = vmatprep.subr.mxu0 0.0
    %219 = vmatpush2.msra.mxu0 0.0
    %220 = vmatprep.subr.mxu0 0.0
    %221 = vmatpush2.msra.mxu0 0.0
    %222 = vmatprep.mubr.f32.mxu0 0.0
    %223 = vmatmul.mubr.f32.gmra.mxu0 %v153
    %v224 = vpop.f32.mrf.mxu0
    %v225 = vadd.f32 0.0, %v224
    %v226 = vpop.f32.mrf.mxu0
    %227 = vmatprep.mubr.f32.mxu0 0.0
    %228 = vmatmul.mubr.f32.gmra.mxu0 %v156
    %v229 = vpop.f32.mrf.mxu0
    %v230 = vadd.f32 0.0, %v229
    %v231 = vpop.f32.mrf.mxu0
    %232 = vdwg.mxu0
    %v233 = vmax.f32 %v225, 0.0
    %v234 = vmax.f32 %v230, 0.0
    %v235 = vld [vmem:[%s3] sm:$0x1]
    %v237 = vlaneseq
    %v238 = vshrl.u32 %v237, 7
    %v239 = vsub.s32 0, %v238
    %v240 = vrot.slane %v235, %v239
    %v242 = vmul.f32 %v233, %v240
    %v243 = vmul.f32 %v234, %v240
    %v244 = vsel %vm64, %v242, 0.0
    %245 = vadd.xlane.f32.xlu0 %v244
    %v246 = vpop.xlane.xlu0 %245
    %v247 = vsel %vm64, %v243, 0.0
    %248 = vadd.xlane.f32.xlu0 %v247
    %v249 = vpop.xlane.xlu0 %248
    %v250 = vxor.u32 %v246, 2147483648
    %v251 = vxor.u32 %v249, 2147483648
    %v252 = vmul.f32 %v250, 1.442695
    %v253 = vpow.pop %v252
    %v254 = vmul.f32 %v251, 1.442695
    %v255 = vpow.pop %v254
    %v256 = vadd.f32 %v253, 1.0
    %v257 = vadd.f32 %v255, 1.0
    %v258 = vrcp.pop %v256
    %v259 = vmul.f32 1.0, %v258
    %v260 = vrcp.pop %v257
    %v261 = vmul.f32 1.0, %v260
    %v262 = vand.u32 2147483647, %v259
    %v263 = vand.u32 2147483647, %v261
    %vm264 = vcmask 7168
    %265 = vst.msk [vmem:[%s4] sm:$0xff] %vm264, %v262
    %266 = vst.msk [vmem:[%s4 + $0x8] sm:$0xff] %vm264, %v263
    // Predicated region
    $region30: #{tpu_custom_call.1} parent=1 // pred_check
      _
    $region31: #{tpu_custom_call.1} parent=1 // pred_check_branch
      %268 = sbr.rel (0) target = $region33
    $region32: #{tpu_custom_call.1} parent=1 // pred_region
      _
    $region33: #{tpu_custom_call.1} parent=1 // pred_fallthru
      _
    // Predicated region
    $region34: #{tpu_custom_call.1} parent=1 // pred_check
      _
    $region35: #{tpu_custom_call.1} parent=1 // pred_check_branch
      %270 = sbr.rel (0) target = $region37
    $region36: #{tpu_custom_call.1} parent=1 // pred_region
      _
    $region37: #{tpu_custom_call.1} parent=1 // pred_fallthru
      _
    %271 = vsyncpa [#allocation3], 1
    %272 = vsyncpa [#allocation5], 1

</llo_original>
